<compile_context>
chip_gen: v7x
topology: tpu7x:2x2x1
jax: 0.10.0
libtpu: 0.0.40
codegen_flags: <defaults>
</compile_context>

<pallas_src>
import functools

import jax
import jax.numpy as jnp
from jax.experimental import pallas as pl
from jax.experimental.pallas import tpu as pltpu


def _round_up(x, m):
    return ((x + m - 1) // m) * m


def _largest_divisor_leq(n, cap):
    for d in range(min(n, cap), 0, -1):
        if n % d == 0:
            return d
    return 1


def _vmem_capacity_bytes():
    try:
        return int(pltpu.get_tpu_info().vmem_capacity_bytes)
    except Exception:
        return 64 * 1024 * 1024  # conservative: v7x has 64 MiB per TensorCore


def _plan_tiles(B, N, P, D_pad, C_pad, in_itemsize):
    """Pick (n_tile, b_tile, B_pad, vmem_limit_bytes) from the VMEM budget."""
    capacity = _vmem_capacity_bytes()
    budget = capacity // 2  # leave headroom for compiler scratch / spills

    # Token tile caps the input block independent of N (keeps v7x's 64 MiB
    # happy at real ViT N); the pooled sum is accumulated across token steps.
    n_tile = _largest_divisor_leq(N, 32)

    # Constant operands (double-buffered by the default pipeline) — count a
    # superset of both weight layouts, conservatively.
    const_bytes = (2 * (P * D_pad + D_pad * C_pad + P * C_pad) * in_itemsize
                   + 2 * (D_pad + C_pad) * 4)

    # Per-batch-row bytes: 2x input block + 2x f32 output block + f32 pooled
    # accumulator scratch.
    per_row = 2 * n_tile * P * in_itemsize + 2 * C_pad * 4 + P * 4

    b_max = max(8, (budget - const_bytes) // per_row)
    B_TILE_CAP = 256  # fills MXU M dim; keeps >=2 "parallel" steps at big B (v7x megacore)
    if B <= min(b_max, B_TILE_CAP):
        b_tile, B_pad = B, B  # full-dim batch block: no batch padding needed
    else:
        b_tile = min(B_TILE_CAP, max(16, (b_max // 16) * 16))
        B_pad = _round_up(B, b_tile)

    need = const_bytes + b_tile * per_row + (4 << 20)
    vmem_limit = int(min(max(need, 32 << 20), capacity))
    return n_tile, b_tile, B_pad, vmem_limit


def _pooled_head_kernel(x_ref, w_ref, b_ref, out_ref, acc_ref, *, inv_n):
    """Mean-pool over tokens, then a single fused (patch-embed @ head) GEMM.

    x_ref : (n_tile, b_tile, P) tokens-first -> leading-axis sum = VPU adds
    w_ref : (P, C_pad)          folded weight  w_patch @ w_head   (bf16)
    b_ref : (1, C_pad)          folded bias    b_patch @ w_head + b_head (f32)
    """
    t = pl.program_id(1)

    @pl.when(t == 0)
    def _init():
        acc_ref[...] = jnp.zeros_like(acc_ref)

    # Token sum accumulated in f32 even though the HBM stream is bf16.
    acc_ref[...] += jnp.sum(x_ref[...].astype(jnp.float32), axis=0)

    @pl.when(t == pl.num_programs(1) - 1)
    def _finalize():
        pooled = (acc_ref[...] * inv_n).astype(w_ref.dtype)      # 'x_mean_pooling'
        logits = jnp.dot(pooled, w_ref[...],
                         preferred_element_type=jnp.float32) + b_ref[...]
        out_ref[...] = logits.astype(out_ref.dtype)


def _pooled_two_gemm_kernel(x_ref, wp_ref, bp_ref, wh_ref, bh_ref, out_ref,
                            acc_ref, *, inv_n):
    """General path: pooled -> patch embedding -> classification head."""
    t = pl.program_id(1)

    @pl.when(t == 0)
    def _init():
        acc_ref[...] = jnp.zeros_like(acc_ref)

    acc_ref[...] += jnp.sum(x_ref[...].astype(jnp.float32), axis=0)

    @pl.when(t == pl.num_programs(1) - 1)
    def _finalize():
        # Pooling hoisted ahead of the (linear) patch embedding — exact only
        # because the stand-in feature model is a single linear layer.
        # TODO(synk): with a real nonlinear ViT feature_model, pool AFTER the
        # transformer blocks instead of hoisting it before the embedding.
        pooled = (acc_ref[...] * inv_n).astype(wp_ref.dtype)
        feats = jnp.dot(pooled, wp_ref[...],
                        preferred_element_type=jnp.float32) + bp_ref[...]
        logits = jnp.dot(feats.astype(wh_ref.dtype), wh_ref[...],
                         preferred_element_type=jnp.float32) + bh_ref[...]
        out_ref[...] = logits.astype(out_ref.dtype)


def model_with_classifier_forward(tokens, w_patch, b_patch, w_head, b_head, *,
                                  fold_linear_feature_model=True,
                                  compute_dtype=jnp.bfloat16):
    """tokens: (N, B, P) float32 patch tokens (tokens-first) -> (B, C) logits."""
    N, B, P = tokens.shape
    D = w_patch.shape[1]
    C = w_head.shape[1]
    D_pad = _round_up(D, 128)
    C_pad = _round_up(C, 128)

    in_itemsize = jnp.dtype(compute_dtype).itemsize
    n_tile, b_tile, B_pad, vmem_limit = _plan_tiles(B, N, P, D_pad, C_pad,
                                                    in_itemsize)

    f32 = jnp.float32
    # bf16 halves the dominant HBM stream; P is deliberately NOT padded in HBM
    # (the BlockSpec uses the full last dim instead).
    x = tokens.astype(compute_dtype)
    if B_pad != B:
        x = jnp.zeros((N, B_pad, P), compute_dtype).at[:, :B, :].set(x)

    grid = (B_pad // b_tile, N // n_tile)
    x_spec = pl.BlockSpec((n_tile, b_tile, P), lambda i, t: (t, i, 0))
    out_spec = pl.BlockSpec((b_tile, C_pad), lambda i, t: (i, 0))

    if fold_linear_feature_model:
        # TODO(synk): exact only while the stand-in feature model is a single
        # linear patch embedding; disable folding for a real nonlinear ViT.
        w_eff = jnp.zeros((P, C_pad), f32).at[:, :C].set(w_patch @ w_head)
        b_eff = jnp.zeros((1, C_pad), f32).at[:, :C].set(
            (b_patch @ w_head + b_head)[None, :])
        kernel = functools.partial(_pooled_head_kernel, inv_n=1.0 / N)
        operands = (x, w_eff.astype(compute_dtype), b_eff)
        in_specs = [x_spec,
                    pl.BlockSpec((P, C_pad), lambda i, t: (0, 0)),
                    pl.BlockSpec((1, C_pad), lambda i, t: (0, 0))]
    else:
        wp = jnp.zeros((P, D_pad), f32).at[:, :D].set(w_patch)
        bp = jnp.zeros((1, D_pad), f32).at[:, :D].set(b_patch[None, :])
        wh = jnp.zeros((D_pad, C_pad), f32).at[:D, :C].set(w_head)
        bh = jnp.zeros((1, C_pad), f32).at[:, :C].set(b_head[None, :])
        kernel = functools.partial(_pooled_two_gemm_kernel, inv_n=1.0 / N)
        operands = (x, wp.astype(compute_dtype), bp,
                    wh.astype(compute_dtype), bh)
        in_specs = [x_spec,
                    pl.BlockSpec((P, D_pad), lambda i, t: (0, 0)),
                    pl.BlockSpec((1, D_pad), lambda i, t: (0, 0)),
                    pl.BlockSpec((D_pad, C_pad), lambda i, t: (0, 0)),
                    pl.BlockSpec((1, C_pad), lambda i, t: (0, 0))]

    out = pl.pallas_call(
        kernel,
        out_shape=jax.ShapeDtypeStruct((B_pad, C_pad), jnp.float32),
        grid_spec=pltpu.PrefetchScalarGridSpec(
            num_scalar_prefetch=0,
            grid=grid,
            in_specs=in_specs,
            out_specs=out_spec,
            scratch_shapes=[pltpu.VMEM((b_tile, P), jnp.float32)]),
        compiler_params=pltpu.CompilerParams(
            dimension_semantics=("parallel", "arbitrary"),
            vmem_limit_bytes=vmem_limit),
    )(*operands)
    return out[:B, :C]


def patchify_nchw(images, patch):
    """NCHW images -> (N, B, C*patch*patch) patch tokens (tokens-first layout,
    so the in-kernel mean pool is a leading-axis VPU reduction)."""
    B, C, H, W = images.shape
    gh, gw = H // patch, W // patch
    x = images.reshape(B, C, gh, patch, gw, patch)
    x = jnp.transpose(x, (2, 4, 0, 1, 3, 5))          # (gh, gw, B, C, ph, pw)
    return x.reshape(gh * gw, B, C * patch * patch)


def reference_forward(tokens, w_patch, b_patch, w_head, b_head):
    """Plain-JAX f32 reference of the module forward (tokens: (N, B, P))."""
    feats = jnp.einsum("nbp,pd->nbd", tokens, w_patch) + b_patch
    pooled = jnp.mean(feats, axis=0)                  # 'x_mean_pooling'
    return pooled @ w_head + b_head


if __name__ == "__main__":
    # Small shapes consistent with the module: batch=2, channels=4, spatial=16
    B, C_in, H, W = 2, 4, 16, 16
    patch = 4
    embed_dim = 32
    num_classes = 16

    N = (H // patch) * (W // patch)          # 16 tokens
    P = C_in * patch * patch                 # 64-dim patch vectors

    key = jax.random.PRNGKey(0)
    k_img, k_wp, k_bp, k_wh, k_bh = jax.random.split(key, 5)

    images = jax.random.normal(k_img, (B, C_in, H, W), dtype=jnp.float32)

    # Deterministic synthetic parameters (shapes from the module semantics).
    w_patch = jax.random.normal(k_wp, (P, embed_dim), dtype=jnp.float32) * 0.02
    b_patch = jax.random.normal(k_bp, (embed_dim,), dtype=jnp.float32) * 0.01
    w_head = jax.random.normal(k_wh, (embed_dim, num_classes), dtype=jnp.float32) * 0.02
    b_head = jax.random.normal(k_bh, (num_classes,), dtype=jnp.float32) * 0.01

    tokens = patchify_nchw(images, patch)                       # (N, B, P)
    ref = reference_forward(tokens, w_patch, b_patch, w_head, b_head)

    # Folded single-GEMM path (default while the feature model is linear).
    logits = model_with_classifier_forward(
        tokens, w_patch, b_patch, w_head, b_head,
        fold_linear_feature_model=True)
    logits = jax.block_until_ready(logits)
    assert logits.shape == (B, num_classes)
    assert jnp.allclose(logits, ref, atol=3e-3, rtol=3e-2), "folded path mismatch"

    # General two-GEMM path (embed -> pool -> head), also validated.
    logits2 = model_with_classifier_forward(
        tokens, w_patch, b_patch, w_head, b_head,
        fold_linear_feature_model=False)
    logits2 = jax.block_until_ready(logits2)
    assert jnp.allclose(logits2, ref, atol=3e-3, rtol=3e-2), "two-GEMM path mismatch"

    # TODO(synk): the real `feature_model` (ViT transformer blocks) is external
    # to this module; a linear patch embedding stands in for forward_features.
    print("KERNEL_OK")
</pallas_src>

<mosaic_0001>
module attributes {stable_mosaic.version = 11 : i64} {
  func.func @_pooled_head_kernel(%arg0: i32, %arg1: i32, %arg2: memref<16x2x64xbf16, #tpu.memory_space<vmem>>, %arg3: memref<64x128xbf16, #tpu.memory_space<vmem>>, %arg4: memref<1x128xf32, #tpu.memory_space<vmem>>, %arg5: memref<2x128xf32, #tpu.memory_space<vmem>>, %arg6: memref<2x64xf32, #tpu.memory_space<vmem>>) attributes {dimension_semantics = [#tpu.dimension_semantics<parallel>, #tpu.dimension_semantics<arbitrary>], iteration_bounds = array<i64: 1, 1>, scalar_prefetch = 0 : i64, scratch_operands = 1 : i64, tpu.core_type = #tpu.core_type<tc>, window_params = [{transform_indices = @transform_0, window_bounds = array<i64: 16, 2, 64>}, {pipeline_mode = #tpu.pipeline_mode<synchronous>, transform_indices = @transform_1, window_bounds = array<i64: 64, 128>}, {pipeline_mode = #tpu.pipeline_mode<synchronous>, transform_indices = @transform_2, window_bounds = array<i64: 1, 128>}, {transform_indices = @transform_3, window_bounds = array<i64: 2, 128>}]} {
    %c0_i32 = arith.constant 0 : i32
    %0 = arith.cmpi eq, %arg1, %c0_i32 : i32
    %1 = arith.extui %0 : i1 to i32
    %c0_i32_0 = arith.constant 0 : i32
    %2 = arith.cmpi ne, %1, %c0_i32_0 : i32
    scf.if %2 {
      %cst_9 = arith.constant 0.000000e+00 : f32
      %12 = vector.broadcast %cst_9 : f32 to vector<2x64xf32>
      %c0_10 = arith.constant 0 : index
      %c0_11 = arith.constant 0 : index
      %13 = vector.load %arg6[%c0_10, %c0_11] : memref<2x64xf32, #tpu.memory_space<vmem>>, vector<2x64xf32>
      tpu.vector_store %arg6[%c0_10, %c0_11], %12 {strides = array<i32>} : memref<2x64xf32, #tpu.memory_space<vmem>>, vector<2x64xf32>,
    } else {
    }
    %c0 = arith.constant 0 : index
    %c0_1 = arith.constant 0 : index
    %3 = vector.load %arg6[%c0, %c0_1] : memref<2x64xf32, #tpu.memory_space<vmem>>, vector<2x64xf32>
    %c0_2 = arith.constant 0 : index
    %c0_3 = arith.constant 0 : index
    %c0_4 = arith.constant 0 : index
    %4 = vector.load %arg2[%c0_2, %c0_3, %c0_4] : memref<16x2x64xbf16, #tpu.memory_space<vmem>>, vector<16x2x64xbf16>
    %5 = arith.extf %4 : vector<16x2x64xbf16> to vector<16x2x64xf32>
    %cst = arith.constant dense<0.000000e+00> : vector<2x64xf32>
    %6 = vector.multi_reduction <add>, %5, %cst [0] : vector<16x2x64xf32> to vector<2x64xf32>
    %7 = arith.addf %3, %6 : vector<2x64xf32>
    %c0_5 = arith.constant 0 : index
    %c0_6 = arith.constant 0 : index
    %8 = vector.load %arg6[%c0_5, %c0_6] : memref<2x64xf32, #tpu.memory_space<vmem>>, vector<2x64xf32>
    tpu.vector_store %arg6[%c0_5, %c0_6], %7 {strides = array<i32>} : memref<2x64xf32, #tpu.memory_space<vmem>>, vector<2x64xf32>,
    %c0_i32_7 = arith.constant 0 : i32
    %9 = arith.cmpi eq, %arg1, %c0_i32_7 : i32
    %10 = arith.extui %9 : i1 to i32
    %c0_i32_8 = arith.constant 0 : i32
    %11 = arith.cmpi ne, %10, %c0_i32_8 : i32
    scf.if %11 {
      %c0_9 = arith.constant 0 : index
      %c0_10 = arith.constant 0 : index
      %12 = vector.load %arg6[%c0_9, %c0_10] : memref<2x64xf32, #tpu.memory_space<vmem>>, vector<2x64xf32>
      %cst_11 = arith.constant 6.250000e-02 : f32
      %13 = vector.broadcast %cst_11 : f32 to vector<2x64xf32>
      %14 = arith.mulf %12, %13 : vector<2x64xf32>
      %15 = arith.truncf %14 : vector<2x64xf32> to vector<2x64xbf16>
      %c0_12 = arith.constant 0 : index
      %c0_13 = arith.constant 0 : index
      %16 = vector.load %arg3[%c0_12, %c0_13] : memref<64x128xbf16, #tpu.memory_space<vmem>>, vector<64x128xbf16>
      %cst_14 = arith.constant dense<0.000000e+00> : vector<2x128xf32>
      %17 = tpu.matmul %15, %16, %cst_14 {dimension_numbers = #tpu.dot_dimension_numbers<[1], [0], [0], [1], [0, 0, 1, 1], [], []>} : vector<2x64xbf16>, vector<64x128xbf16>, vector<2x128xf32> -> vector<2x128xf32>
      %c0_15 = arith.constant 0 : index
      %c0_16 = arith.constant 0 : index
      %18 = vector.load %arg4[%c0_15, %c0_16] : memref<1x128xf32, #tpu.memory_space<vmem>>, vector<1x128xf32>
      %19 = vector.broadcast %18 : vector<1x128xf32> to vector<2x128xf32>
      %20 = arith.addf %17, %19 : vector<2x128xf32>
      %c0_17 = arith.constant 0 : index
      %c0_18 = arith.constant 0 : index
      %21 = vector.load %arg5[%c0_17, %c0_18] : memref<2x128xf32, #tpu.memory_space<vmem>>, vector<2x128xf32>
      tpu.vector_store %arg5[%c0_17, %c0_18], %20 {strides = array<i32>} : memref<2x128xf32, #tpu.memory_space<vmem>>, vector<2x128xf32>,
    } else {
    }
    return
  }
  func.func @transform_0(%arg0: i32, %arg1: i32) -> (i32, i32, i32) {
    %c0_i32 = arith.constant 0 : i32
    %c0_i32_0 = arith.constant 0 : i32
    return %arg1, %arg0, %c0_i32 : i32, i32, i32
  }
  func.func @transform_1(%arg0: i32, %arg1: i32) -> (i32, i32) {
    %c0_i32 = arith.constant 0 : i32
    %c0_i32_0 = arith.constant 0 : i32
    %c0_i32_1 = arith.constant 0 : i32
    return %c0_i32, %c0_i32_0 : i32, i32
  }
  func.func @transform_2(%arg0: i32, %arg1: i32) -> (i32, i32) {
    %c0_i32 = arith.constant 0 : i32
    %c0_i32_0 = arith.constant 0 : i32
    %c0_i32_1 = arith.constant 0 : i32
    return %c0_i32, %c0_i32_0 : i32, i32
  }
  func.func @transform_3(%arg0: i32, %arg1: i32) -> (i32, i32) {
    %c0_i32 = arith.constant 0 : i32
    %c0_i32_0 = arith.constant 0 : i32
    return %arg0, %c0_i32 : i32, i32
  }
}

</mosaic_0001>

<llo_original>
// kernel: tpu_custom_call.1
$region0: #{tpu_custom_call.1}
  #allocation0 [shape = 'u32[]', space=smem, size = 0x4, offset = 0x4, fixed_abs, tag = 'smem constant byte address 0x4 - core index']
  #allocation1 [shape = 'u32[144,128]{1,0:T(1,128)}', space=vmem, size = 0x12000, scoped, tag = 'internal scratch']
  #allocation2 [shape = 'f32[2,64]{1,0:T(2,128)}', space=vmem, size = 0x400, scoped, tag = 'scratch operand']
  %s0 = inlined_call_operand.hbm [shape: bf16[16,2,64], index: 0, kind: input, shape index: {}]
  %s1 = inlined_call_operand.hbm [shape: bf16[64,128], index: 1, kind: input, shape index: {}]
  %s2 = inlined_call_operand.vmem [shape: f32[1,128], index: 2, kind: input, shape index: {}]
  %s3 = inlined_call_operand.hbm [shape: f32[2,128], index: 3, kind: output, shape index: {}]
  %s4 = sld [smem:[#allocation0]]
  $region38: #{tpu_custom_call.1} parent=0
    _
  %s6 = ssub.s32 1, %s4
  %s7 = scalar_select 0, %s6, %s4
  $region1: #{tpu_custom_call.1} parent=0
    #allocation3 [shape = 'u8[8192]{0}', space=vmem, size = 0x2000, scoped, tag = 'input window, operand 0, single buffered']
    #allocation4 [shape = 's32[1]{0}', space=sflag, size = 0x4, scoped, tag = 'scoped memory for tpu_custom_call.1']
    #allocation5 [shape = 's32[1]{0}', space=sflag, size = 0x4, scoped, tag = 'scoped memory for tpu_custom_call.1']
    #allocation6 [shape = 'u8[16384]{0}', space=vmem, size = 0x4000, scoped, tag = 'input window, operand 1, single buffered']
    #allocation7 [shape = 's32[1]{0}', space=sflag, size = 0x4, scoped, tag = 'scoped memory for tpu_custom_call.1']
    #allocation8 [shape = 'u8[1024]{0}', space=vmem, size = 0x400, scoped, tag = 'output window, operand 0, single buffered']
    %8 = vsyncpa [#allocation4], 0
    %9 = vsyncpa [#allocation7], 0
    %10 = vsyncpa [#allocation5], 0
    // Predicated region
    $region2: #{tpu_custom_call.1} parent=1 // pred_check
      _
    $region3: #{tpu_custom_call.1} parent=1 // pred_check_branch
      %12 = sbr.rel (0) target = $region5
    $region4: #{tpu_custom_call.1} parent=1 // pred_region
      %s14 = ssub.s32 256, 256
      %15 = vsyncadd [#allocation4], %s14
      %s16 = sshll.u32 [#allocation3], 4
      %s17 = int_to_ptr.vmem [resolvable:$true] %s16
      %22 = dma.hbm_to_vmem [thread:$0]  %s0, 256, %s17, [#allocation4], 16, 16, 1
    $region5: #{tpu_custom_call.1} parent=1 // pred_fallthru
      _
    // Predicated region
    $region6: #{tpu_custom_call.1} parent=1 // pred_check
      _
    $region7: #{tpu_custom_call.1} parent=1 // pred_check_branch
      %24 = sbr.rel (0) target = $region9
    $region8: #{tpu_custom_call.1} parent=1 // pred_region
      %s26 = ssub.s32 512, 512
      %27 = vsyncadd [#allocation7], %s26
      %s28 = sshll.u32 [#allocation6], 4
      %s29 = int_to_ptr.vmem [resolvable:$true] %s28
      %34 = dma.hbm_to_vmem [thread:$0]  %s1, 512, %s29, [#allocation7], 64, 64, 4
    $region9: #{tpu_custom_call.1} parent=1 // pred_fallthru
      _
    // Predicated region
    $region10: #{tpu_custom_call.1} parent=1 // pred_check
      _
    $region11: #{tpu_custom_call.1} parent=1 // pred_check_branch
      %36 = sbr.rel (0) target = $region13
    $region12: #{tpu_custom_call.1} parent=1 // pred_region
      _
    $region13: #{tpu_custom_call.1} parent=1 // pred_fallthru
      _
    // Predicated region
    $region14: #{tpu_custom_call.1} parent=1 // pred_check
      _
    $region15: #{tpu_custom_call.1} parent=1 // pred_check_branch
      %38 = sbr.rel (0) target = $region17
    $region16: #{tpu_custom_call.1} parent=1 // pred_region
      %39 = dma.done [#allocation4], 256
    $region17: #{tpu_custom_call.1} parent=1 // pred_fallthru
      _
    // Predicated region
    $region18: #{tpu_custom_call.1} parent=1 // pred_check
      _
    $region19: #{tpu_custom_call.1} parent=1 // pred_check_branch
      %41 = sbr.rel (0) target = $region21
    $region20: #{tpu_custom_call.1} parent=1 // pred_region
      %42 = dma.done [#allocation7], 512
    $region21: #{tpu_custom_call.1} parent=1 // pred_fallthru
      _
    %p44 = scmp.eq.s32.totalorder 0, 0
    // Predicated region
    $region22: #{tpu_custom_call.1} parent=1 // pred_check
      %p45 = pneg %p44
    $region23: #{tpu_custom_call.1} parent=1 // pred_check_branch
      %47 = sbr.rel (%p45) target = $region25
    $region24: #{tpu_custom_call.1} parent=1 // pred_region
      %vm48 = vcmask 517120
      %49 = vst.msk [vmem:[#allocation2] sm:$0x3] %vm48, 0.0
    $region25: #{tpu_custom_call.1} parent=1 // pred_fallthru
      _
    %v50 = vld [vmem:[#allocation2] sm:$0x3]
    %v51 = vld [vmem:[#allocation3] sm:$0x1]
    %v52 = vld [vmem:[#allocation3 + $0x1] sm:$0x1]
    %v53 = vld [vmem:[#allocation3 + $0x2] sm:$0x1]
    %v54 = vld [vmem:[#allocation3 + $0x3] sm:$0x1]
    %v55 = vld [vmem:[#allocation3 + $0x4] sm:$0x1]
    %v56 = vld [vmem:[#allocation3 + $0x5] sm:$0x1]
    %v57 = vld [vmem:[#allocation3 + $0x6] sm:$0x1]
    %v58 = vld [vmem:[#allocation3 + $0x7] sm:$0x1]
    %v59 = vld [vmem:[#allocation3 + $0x8] sm:$0x1]
    %v60 = vld [vmem:[#allocation3 + $0x9] sm:$0x1]
    %v61 = vld [vmem:[#allocation3 + $0xa] sm:$0x1]
    %v62 = vld [vmem:[#allocation3 + $0xb] sm:$0x1]
    %v63 = vld [vmem:[#allocation3 + $0xc] sm:$0x1]
    %v64 = vld [vmem:[#allocation3 + $0xd] sm:$0x1]
    %v65 = vld [vmem:[#allocation3 + $0xe] sm:$0x1]
    %v66 = vld [vmem:[#allocation3 + $0xf] sm:$0x1]
    %v67 = vunpack.c.l.bf16 %v51
    %v68 = vunpack.c.l.bf16 %v52
    %v69 = vunpack.c.l.bf16 %v53
    %v70 = vunpack.c.l.bf16 %v54
    %v71 = vunpack.c.l.bf16 %v55
    %v72 = vunpack.c.l.bf16 %v56
    %v73 = vunpack.c.l.bf16 %v57
    %v74 = vunpack.c.l.bf16 %v58
    %v75 = vunpack.c.l.bf16 %v59
    %v76 = vunpack.c.l.bf16 %v60
    %v77 = vunpack.c.l.bf16 %v61
    %v78 = vunpack.c.l.bf16 %v62
    %v79 = vunpack.c.l.bf16 %v63
    %v80 = vunpack.c.l.bf16 %v64
    %v81 = vunpack.c.l.bf16 %v65
    %v82 = vunpack.c.l.bf16 %v66
    %vm83 = vcmask 517120
    %v84 = vsel %vm83, %v67, 0.0
    %v85 = vsel %vm83, %v68, 0.0
    %v86 = vadd.f32 %v84, %v85
    %v87 = vsel %vm83, %v69, 0.0
    %v88 = vadd.f32 %v86, %v87
    %v89 = vsel %vm83, %v70, 0.0
    %v90 = vadd.f32 %v88, %v89
    %v91 = vsel %vm83, %v71, 0.0
    %v92 = vadd.f32 %v90, %v91
    %v93 = vsel %vm83, %v72, 0.0
    %v94 = vadd.f32 %v92, %v93
    %v95 = vsel %vm83, %v73, 0.0
    %v96 = vadd.f32 %v94, %v95
    %v97 = vsel %vm83, %v74, 0.0
    %v98 = vadd.f32 %v96, %v97
    %v99 = vsel %vm83, %v75, 0.0
    %v100 = vadd.f32 %v98, %v99
    %v101 = vsel %vm83, %v76, 0.0
    %v102 = vadd.f32 %v100, %v101
    %v103 = vsel %vm83, %v77, 0.0
    %v104 = vadd.f32 %v102, %v103
    %v105 = vsel %vm83, %v78, 0.0
    %v106 = vadd.f32 %v104, %v105
    %v107 = vsel %vm83, %v79, 0.0
    %v108 = vadd.f32 %v106, %v107
    %v109 = vsel %vm83, %v80, 0.0
    %v110 = vadd.f32 %v108, %v109
    %v111 = vsel %vm83, %v81, 0.0
    %v112 = vadd.f32 %v110, %v111
    %v113 = vsel %vm83, %v82, 0.0
    %v114 = vadd.f32 %v112, %v113
    %v115 = vadd.f32 %v50, %v114
    %116 = vst.msk [vmem:[#allocation2] sm:$0x3] %vm83, %v115
    // Predicated region
    $region26: #{tpu_custom_call.1} parent=1 // pred_check
      %p117 = pneg %p44
    $region27: #{tpu_custom_call.1} parent=1 // pred_check_branch
      %119 = sbr.rel (%p117) target = $region29
    $region28: #{tpu_custom_call.1} parent=1 // pred_region
      %v120 = vld [vmem:[#allocation2] sm:$0x3]
      %v121 = vmul.f32 %v120, 0.0625
      %v122 = vpack.c.bf16 %v121, %v121
      %v123 = vld [vmem:[#allocation6] sm:$0xf]
      %v124 = vld [vmem:[#allocation6 + $0x4] sm:$0xf]
      %v125 = vld [vmem:[#allocation6 + $0x8] sm:$0xf]
      %v126 = vld [vmem:[#allocation6 + $0xc] sm:$0xf]
      %v127 = vld [vmem:[#allocation6 + $0x10] sm:$0xf]
      %v128 = vld [vmem:[#allocation6 + $0x14] sm:$0xf]
      %v129 = vld [vmem:[#allocation6 + $0x18] sm:$0xf]
      %v130 = vld [vmem:[#allocation6 + $0x1c] sm:$0xf]
      %v131 = vld [vmem:[%s2] sm:$0x1]
      %v133 = vlaneseq
      %v134 = vshrl.u32 %v133, 7
      %v135 = vsub.s32 0, %v134
      %v136 = vrot.slane %v131, %v135
      %v146 = vunpack.c.l.b16 %v123
      %v147 = vunpack.c.l.b16 %v124
      %v148 = vunpack.c.l.b16 %v125
      %v149 = vunpack.c.l.b16 %v126
      %v150 = vunpack.c.l.b16 %v127
      %v151 = vunpack.c.l.b16 %v128
      %v152 = vunpack.c.l.b16 %v129
      %v153 = vunpack.c.l.b16 %v130
      %v154 = vpack.c.b16 %v147, %v146
      %v155 = vpack.c.b16 %v149, %v148
      %v156 = vpack.c.b16 %v151, %v150
      %v157 = vpack.c.b16 %v153, %v152
      %vm162 = vcmask 523264
      %v164 = vsel %vm162, %v122, 0
      %166 = vmatprep.subr.bf16.mxu0 0
      %167 = vmatpush1.bf16.msra.mxu0 %v154
      %168 = vmatprep.subr.bf16.mxu0 0
      %169 = vmatpush1.bf16.msra.mxu0 %v155
      %170 = vmatprep.subr.bf16.mxu0 0
      %171 = vmatpush1.bf16.msra.mxu0 %v156
      %172 = vmatprep.subr.bf16.mxu0 0
      %173 = vmatpush1.bf16.msra.mxu0 %v157
      %174 = vmatprep.subr.bf16.mxu0 0
      %175 = vmatpush1.bf16.msra.mxu0 0
      %176 = vmatprep.subr.bf16.mxu0 0
      %177 = vmatpush1.bf16.msra.mxu0 0
      %178 = vmatprep.subr.bf16.mxu0 0
      %179 = vmatpush1.bf16.msra.mxu0 0
      %180 = vmatprep.subr.bf16.mxu0 0
      %181 = vmatpush1.bf16.msra.mxu0 0
      %182 = vmatprep.subr.bf16.mxu0 0
      %183 = vmatpush1.bf16.msra.mxu0 0
      %184 = vmatprep.subr.bf16.mxu0 0
      %185 = vmatpush1.bf16.msra.mxu0 0
      %186 = vmatprep.subr.bf16.mxu0 0
      %187 = vmatpush1.bf16.msra.mxu0 0
      %188 = vmatprep.subr.bf16.mxu0 0
      %189 = vmatpush1.bf16.msra.mxu0 0
      %190 = vmatprep.subr.bf16.mxu0 0
      %191 = vmatpush1.bf16.msra.mxu0 0
      %192 = vmatprep.subr.bf16.mxu0 0
      %193 = vmatpush1.bf16.msra.mxu0 0
      %194 = vmatprep.subr.bf16.mxu0 0
      %195 = vmatpush1.bf16.msra.mxu0 0
      %196 = vmatprep.subr.bf16.mxu0 0
      %197 = vmatpush1.bf16.msra.mxu0 0
      %198 = vmatprep.mubr.bf16.mxu0 0
      %199 = vmatmul.mubr.bf16.gmra.mrb[0].mxu0 %v164
      %v200 = vpop.f32.mrb[0].mxu0
      %v201 = vadd.f32 %v136, %v200
      %v202 = vpop.f32.mrb[0].mxu0
      %v203 = vpop.f32.mrb[0].mxu0
      %v204 = vpop.f32.mrb[0].mxu0
      %205 = vdwg.mxu0
      %206 = vst [vmem:[#allocation8] sm:$0x3] %v201
    $region29: #{tpu_custom_call.1} parent=1 // pred_fallthru
      _
    // Predicated region
    $region30: #{tpu_custom_call.1} parent=1 // pred_check
      _
    $region31: #{tpu_custom_call.1} parent=1 // pred_check_branch
      %208 = sbr.rel (0) target = $region33
    $region32: #{tpu_custom_call.1} parent=1 // pred_region
      %s210 = ssub.s32 32, 32
      %211 = vsyncadd [#allocation5], %s210
      %s213 = sshll.u32 [#allocation8], 4
      %s214 = int_to_ptr.vmem [resolvable:$true] %s213
      %216 = dma.vmem_to_hbm [thread:$0]  %s214, 32, %s3, [#allocation5]
    $region33: #{tpu_custom_call.1} parent=1 // pred_fallthru
      _
    // Predicated region
    $region34: #{tpu_custom_call.1} parent=1 // pred_check
      _
    $region35: #{tpu_custom_call.1} parent=1 // pred_check_branch
      %218 = sbr.rel (0) target = $region37
    $region36: #{tpu_custom_call.1} parent=1 // pred_region
      %219 = dma.done [#allocation5], 32
    $region37: #{tpu_custom_call.1} parent=1 // pred_fallthru
      _
    %220 = vsyncpa [#allocation4], 1
    %221 = vsyncpa [#allocation7], 1
    %222 = vsyncpa [#allocation5], 1

</llo_original>
